<compile_context>
chip_gen: v7x
topology: tpu7x:2x2x1
jax: 0.10.0
libtpu: 0.0.40
codegen_flags: <defaults>
</compile_context>

<pallas_src>
import functools

import jax
import jax.numpy as jnp
from jax.experimental import pallas as pl
from jax.experimental.pallas import tpu as pltpu

BN_EPS = 1e-5     # torch.nn.BatchNorm1d default eps
NC_STATS = 2      # core-split factor for the stats pass (v7x megacore)


def _round_up(a, b):
    return ((a + b - 1) // b) * b


def _full_spec(shape):
    return pl.BlockSpec(shape, lambda *_: (0,) * len(shape))


# --------------------------------------------------------------------------
# Phase 1: conv + masked BatchNorm statistics (sum, sum of squares), one
# partial accumulator per core-split slice, accumulated over the inner
# "arbitrary" row-tile axis.
# --------------------------------------------------------------------------
def _stats_kernel(patches_ref, cw_ref, cb_ref, sum_ref, sumsq_ref, *,
                  l_out, tile_m):
    c = pl.program_id(0)                     # core-split axis ("parallel")
    i = pl.program_id(1)                     # row-tile axis ("arbitrary")
    gt = c * pl.num_programs(1) + i          # global row-tile index

    @pl.when(i == 0)
    def _():
        sum_ref[...] = jnp.zeros_like(sum_ref)
        sumsq_ref[...] = jnp.zeros_like(sumsq_ref)

    # Conv1d (in_ch=1) in transposed layout: (H_pad, K) @ (K, TILE_M) -> f32.
    z = jnp.dot(cw_ref[...], patches_ref[...],
                preferred_element_type=jnp.float32) + cb_ref[...]

    # Only boundary / fully-padded tiles need the out-of-range column mask;
    # all interior tiles take the cheap unmasked path.
    need_mask = (gt + 1) * tile_m > l_out

    @pl.when(jnp.logical_not(need_mask))
    def _():
        sum_ref[...] += jnp.sum(z, axis=1, keepdims=True)
        sumsq_ref[...] += jnp.sum(z * z, axis=1, keepdims=True)

    @pl.when(need_mask)
    def _():
        col = jax.lax.broadcasted_iota(jnp.int32, z.shape, 1) + gt * tile_m
        zm = jnp.where(col < l_out, z, 0.0)
        sum_ref[...] += jnp.sum(zm, axis=1, keepdims=True)
        sumsq_ref[...] += jnp.sum(zm * zm, axis=1, keepdims=True)


# --------------------------------------------------------------------------
# Phase 2: conv recompute -> BN affine -> hidden Linear+ReLU (bf16 matmuls,
# f32 accumulation) -> join layer as VPU multiply + sublane reduce into a
# lane-dense (1, TILE_M) output block.
# --------------------------------------------------------------------------
def _mlp_kernel(patches_ref, cw_ref, cb_ref, scale_ref, shift_ref,
                hw_ref, hb_ref, jw_ref, jb_ref, out_ref, *, n_hidden_layers):
    z = jnp.dot(cw_ref[...], patches_ref[...],
                preferred_element_type=jnp.float32) + cb_ref[...]

    # BatchNorm folded into one affine (scale/shift precomputed outside).
    z = z * scale_ref[...] + shift_ref[...]

    # Hidden layers: z_T <- relu(W @ z_T + b); W in bf16, f32 accumulate.
    for i in range(n_hidden_layers):
        w = hw_ref[i]
        z = jnp.maximum(
            jnp.dot(w, z.astype(w.dtype),
                    preferred_element_type=jnp.float32) + hb_ref[i],
            0.0)

    # linear_join (out_features=1): VPU multiply + sublane (XLU) reduce.
    out_ref[...] = jnp.sum(z * jw_ref[...], axis=0, keepdims=True) + jb_ref[...]


@functools.partial(
    jax.jit,
    static_argnames=("n_lags", "n_hidden_layers", "sps", "use_bf16", "max_tile_m"))
def cnn_forward(x, params, *, n_lags, n_hidden_layers, sps,
                use_bf16=True, max_tile_m=2048):
    """x: (L,) float32. Returns y: (L_out,) float32, L_out = (L-1)//sps + 1."""
    L = x.shape[0]
    K = n_lags
    H = params["conv_w"].shape[0]
    pad = n_lags // 2
    L_out = (L + 2 * pad - K) // sps + 1          # == (L - 1) // sps + 1

    # Features live on the sublane axis -> pad only to the sublane pack.
    H_pad = _round_up(H, 16 if use_bf16 else 8)
    padH = H_pad - H
    w_dt = jnp.bfloat16 if use_bf16 else jnp.float32

    # ---- pad / arrange parameters for the transposed layout ----
    cw = jnp.pad(params["conv_w"].astype(jnp.float32),
                 ((0, padH), (0, 0))).astype(w_dt)                  # (H_pad, K)
    cb = jnp.pad(params["conv_b"].astype(jnp.float32), (0, padH))[:, None]
    gamma = jnp.pad(params["bn_gamma"].astype(jnp.float32), (0, padH),
                    constant_values=1.0)[:, None]
    beta = jnp.pad(params["bn_beta"].astype(jnp.float32), (0, padH))[:, None]
    if n_hidden_layers > 0:
        hw = jnp.pad(params["hidden_w"].astype(jnp.float32),
                     ((0, 0), (0, padH), (0, padH))).astype(w_dt)   # (nL,H_pad,H_pad)
        hb = jnp.pad(params["hidden_b"].astype(jnp.float32),
                     ((0, 0), (0, padH)))[:, :, None]               # (nL,H_pad,1)
    else:
        hw = jnp.zeros((1, H_pad, H_pad), w_dt)
        hb = jnp.zeros((1, H_pad, 1), jnp.float32)
    jw = jnp.pad(params["join_w"][0].astype(jnp.float32), (0, padH))[:, None]
    jb = params["join_b"].astype(jnp.float32)[None, :]              # (1, 1)

    # ---- tile size derived from an explicit VMEM budget ----
    patch_itemsize = 2 if use_bf16 else 4
    weight_bytes = sum(int(a.size) * a.dtype.itemsize
                       for a in (cw, cb, gamma, beta, hw, hb, jw, jb))

    def vmem_needed(tile):
        return (2 * K * tile * patch_itemsize     # double-buffered patches tile
                + 2 * weight_bytes                # every input BlockSpec is 2x buffered
                + 2 * tile * 4                    # double-buffered (1, tile) output
                + 6 * H_pad * tile * 4            # in-kernel activation working set
                + (2 << 20))                      # headroom

    TILE_M = _round_up(min(max_tile_m, _round_up(L_out, 128)), 128)
    VMEM_BUDGET = 40 << 20                        # stay well inside v7x's 64 MiB
    while TILE_M > 128 and vmem_needed(TILE_M) > VMEM_BUDGET:
        TILE_M = max(128, _round_up(TILE_M // 2, 128))
    vmem_limit = int(min(max(vmem_needed(TILE_M), 4 << 20), 48 << 20))

    NT = pl.cdiv(L_out, TILE_M)                   # phase-2 row tiles
    NT1 = pl.cdiv(NT, NC_STATS)                   # per-core row tiles, phase 1
    L_out_pad1 = NC_STATS * NT1 * TILE_M          # phase-1 column padding
    L_out_pad2 = NT * TILE_M                      # phase-2 column padding

    # ---- im2col in transposed layout: patches_T[k, t] = x_pad[t*sps + k] ----
    need_len = (L_out_pad1 - 1) * sps + K
    extra = max(0, need_len - (L + 2 * pad))
    x_pad = jnp.pad(x, (pad, pad + extra))
    idx = jnp.arange(K)[:, None] + (jnp.arange(L_out_pad1) * sps)[None, :]
    patches_T = x_pad[idx].astype(w_dt)           # (K, L_out_pad1)

    # ---------------- phase 1: batch statistics ----------------
    s_parts, ss_parts = pl.pallas_call(
        functools.partial(_stats_kernel, l_out=L_out, tile_m=TILE_M),
        out_shape=(jax.ShapeDtypeStruct((NC_STATS, H_pad, 1), jnp.float32),
                   jax.ShapeDtypeStruct((NC_STATS, H_pad, 1), jnp.float32)),
        grid_spec=pltpu.PrefetchScalarGridSpec(
            num_scalar_prefetch=0,
            grid=(NC_STATS, NT1),
            in_specs=[
                pl.BlockSpec((K, TILE_M), lambda c, i: (0, c * NT1 + i)),
                _full_spec((H_pad, K)),
                _full_spec((H_pad, 1)),
            ],
            out_specs=[pl.BlockSpec((None, H_pad, 1), lambda c, i: (c, 0, 0)),
                       pl.BlockSpec((None, H_pad, 1), lambda c, i: (c, 0, 0))],
        ),
        compiler_params=pltpu.CompilerParams(
            dimension_semantics=("parallel", "arbitrary"),
            vmem_limit_bytes=vmem_limit),
    )(patches_T, cw, cb)

    # ---- BN (training mode, biased variance) folded into one affine ----
    # NOTE: E[z^2] - E[z]^2 in f32; fine at the 1e-2 tolerances used here.
    s = jnp.sum(s_parts, axis=0)
    ss = jnp.sum(ss_parts, axis=0)
    mean = s / float(L_out)
    var = jnp.maximum(ss / float(L_out) - mean * mean, 0.0)
    inv_std = jax.lax.rsqrt(var + BN_EPS)
    scale = gamma * inv_std
    shift = beta - mean * scale

    # ---------------- phase 2: normalize + MLP + join ----------------
    # Kept as a separate megacore-"parallel" call (fusing with phase 1 would
    # serialize it on v7x); the tiny host-side BN fold above is the only XLA
    # segment in between.
    y = pl.pallas_call(
        functools.partial(_mlp_kernel, n_hidden_layers=n_hidden_layers),
        out_shape=jax.ShapeDtypeStruct((1, L_out_pad2), jnp.float32),
        grid_spec=pltpu.PrefetchScalarGridSpec(
            num_scalar_prefetch=0,
            grid=(NT,),
            in_specs=[
                pl.BlockSpec((K, TILE_M), lambda i: (0, i)),
                _full_spec((H_pad, K)),
                _full_spec((H_pad, 1)),
                _full_spec((H_pad, 1)),
                _full_spec((H_pad, 1)),
                _full_spec(tuple(hw.shape)),
                _full_spec(tuple(hb.shape)),
                _full_spec((H_pad, 1)),
                _full_spec((1, 1)),
            ],
            out_specs=pl.BlockSpec((1, TILE_M), lambda i: (0, i)),
        ),
        compiler_params=pltpu.CompilerParams(
            dimension_semantics=("parallel",),
            vmem_limit_bytes=vmem_limit),
    )(patches_T, cw, cb, scale, shift, hw, hb, jw, jb)

    # Columns >= L_out of the last tile contain garbage (padded patches) and
    # MUST be sliced off; phase-1 masks them out of the statistics.
    return y[0, :L_out]  # .squeeze() -> (L_out,)


# --------------------------------------------------------------------------
# Parameter init (torch-shaped) and pure-JAX reference (same precision policy)
# --------------------------------------------------------------------------
def init_params(key, n_lags, n_hidden_units, n_hidden_layers):
    H, K = n_hidden_units, n_lags
    keys = jax.random.split(key, 4 + 2 * max(n_hidden_layers, 1))

    def unif(k, shape, fan_in):
        bound = 1.0 / (fan_in ** 0.5)
        return jax.random.uniform(k, shape, jnp.float32, -bound, bound)

    conv_w = unif(keys[0], (H, K), K)        # torch Conv1d weight (H, 1, K) squeezed
    conv_b = unif(keys[1], (H,), K)
    hidden_w = [unif(keys[2 + 2 * i], (H, H), H) for i in range(n_hidden_layers)]
    hidden_b = [unif(keys[3 + 2 * i], (H,), H) for i in range(n_hidden_layers)]
    join_w = unif(keys[2 + 2 * n_hidden_layers], (1, H), H)
    join_b = unif(keys[3 + 2 * n_hidden_layers], (1,), H)

    return {
        "conv_w": conv_w,                                  # (H, K)
        "conv_b": conv_b,                                  # (H,)
        "bn_gamma": jnp.ones((H,), jnp.float32),
        "bn_beta": jnp.zeros((H,), jnp.float32),
        "hidden_w": (jnp.stack(hidden_w) if n_hidden_layers
                     else jnp.zeros((0, H, H), jnp.float32)),   # (nL, H, H)
        "hidden_b": (jnp.stack(hidden_b) if n_hidden_layers
                     else jnp.zeros((0, H), jnp.float32)),      # (nL, H)
        "join_w": join_w,                                  # (1, H)
        "join_b": join_b,                                  # (1,)
    }


def reference_forward(x, params, *, n_lags, sps, use_bf16=True):
    """Pure-JAX reference of the same math / precision policy."""
    pad = n_lags // 2
    L = x.shape[0]
    K = n_lags
    L_out = (L + 2 * pad - K) // sps + 1
    x_pad = jnp.pad(x, (pad, pad))
    idx = (jnp.arange(L_out) * sps)[:, None] + jnp.arange(K)[None, :]
    patches = x_pad[idx]
    if use_bf16:
        z = jnp.dot(patches.astype(jnp.bfloat16),
                    params["conv_w"].astype(jnp.bfloat16).T,
                    preferred_element_type=jnp.float32) + params["conv_b"][None, :]
    else:
        z = patches @ params["conv_w"].T + params["conv_b"][None, :]
    mean = jnp.mean(z, axis=0, keepdims=True)
    var = jnp.mean((z - mean) ** 2, axis=0, keepdims=True)
    z = ((z - mean) * jax.lax.rsqrt(var + BN_EPS) * params["bn_gamma"][None, :]
         + params["bn_beta"][None, :])
    for i in range(params["hidden_w"].shape[0]):
        w = params["hidden_w"][i]
        b = params["hidden_b"][i]
        if use_bf16:
            zm = jnp.dot(z.astype(jnp.bfloat16), w.astype(jnp.bfloat16).T,
                         preferred_element_type=jnp.float32)
        else:
            zm = z @ w.T
        z = jnp.maximum(zm + b[None, :], 0.0)
    return (z @ params["join_w"].T + params["join_b"][None, :])[:, 0]


if __name__ == "__main__":
    # Small config consistent with the module: n_lags odd ((n_lags+1) % 2 == 0),
    # dropout=None so hidden layers are Linear+ReLU only.
    n_lags = 7
    n_hidden_units = 32
    n_hidden_layers = 2
    samples_per_symbol = 2
    seq_len = 64  # -> L_out = (64 - 1) // 2 + 1 = 32

    key = jax.random.PRNGKey(0)
    kx, kp = jax.random.split(key)
    x = jax.random.normal(kx, (seq_len,), jnp.float32)
    params = init_params(kp, n_lags, n_hidden_units, n_hidden_layers)

    y = cnn_forward(x, params,
                    n_lags=n_lags,
                    n_hidden_layers=n_hidden_layers,
                    sps=samples_per_symbol)
    y = jax.block_until_ready(y)

    y_ref = reference_forward(x, params, n_lags=n_lags, sps=samples_per_symbol)
    assert y.shape == ((seq_len - 1) // samples_per_symbol + 1,)
    max_err = float(jnp.max(jnp.abs(y - y_ref)))
    assert jnp.allclose(y, y_ref, atol=1e-2, rtol=1e-2), (
        f"mismatch vs reference (max abs diff {max_err})")

    print("KERNEL_OK")
</pallas_src>

<mosaic_0001>
module attributes {stable_mosaic.version = 11 : i64} {
  func.func @_stats_kernel(%arg0: i32, %arg1: i32, %arg2: memref<7x128xbf16, #tpu.memory_space<vmem>>, %arg3: memref<32x7xbf16, #tpu.memory_space<vmem>>, %arg4: memref<32x1xf32, #tpu.memory_space<vmem>>, %arg5: memref<1x32x1xf32, #tpu.memory_space<vmem>>, %arg6: memref<1x32x1xf32, #tpu.memory_space<vmem>>) attributes {dimension_semantics = [#tpu.dimension_semantics<parallel>, #tpu.dimension_semantics<arbitrary>], iteration_bounds = array<i64: 2, 1>, scalar_prefetch = 0 : i64, scratch_operands = 0 : i64, tpu.core_type = #tpu.core_type<tc>, window_params = [{transform_indices = @transform_0, window_bounds = array<i64: 7, 128>}, {pipeline_mode = #tpu.pipeline_mode<synchronous>, transform_indices = @transform_1, window_bounds = array<i64: 32, 7>}, {pipeline_mode = #tpu.pipeline_mode<synchronous>, transform_indices = @transform_2, window_bounds = array<i64: 32, 1>}, {transform_indices = @transform_3, window_bounds = array<i64: 1, 32, 1>}, {transform_indices = @transform_4, window_bounds = array<i64: 1, 32, 1>}]} {
    %c1_i32 = arith.constant 1 : i32
    %0 = arith.muli %arg0, %c1_i32 : i32
    %1 = arith.addi %0, %arg1 : i32
    %c0_i32 = arith.constant 0 : i32
    %2 = arith.cmpi eq, %arg1, %c0_i32 : i32
    %3 = arith.extui %2 : i1 to i32
    %c0_i32_0 = arith.constant 0 : i32
    %4 = arith.cmpi ne, %3, %c0_i32_0 : i32
    scf.if %4 {
      %cst_9 = arith.constant 0.000000e+00 : f32
      %19 = vector.broadcast %cst_9 : f32 to vector<32x1xf32>
      %c0_10 = arith.constant 0 : index
      %c0_11 = arith.constant 0 : index
      %c0_12 = arith.constant 0 : index
      %20 = vector.load %arg5[%c0_10, %c0_11, %c0_12] : memref<1x32x1xf32, #tpu.memory_space<vmem>>, vector<1x32x1xf32>
      %21 = vector.shape_cast %20 : vector<1x32x1xf32> to vector<32x1xf32>
      %22 = vector.shape_cast %19 : vector<32x1xf32> to vector<1x32x1xf32>
      tpu.vector_store %arg5[%c0_10, %c0_11, %c0_12], %22 {strides = array<i32>} : memref<1x32x1xf32, #tpu.memory_space<vmem>>, vector<1x32x1xf32>,
      %cst_13 = arith.constant 0.000000e+00 : f32
      %23 = vector.broadcast %cst_13 : f32 to vector<32x1xf32>
      %c0_14 = arith.constant 0 : index
      %c0_15 = arith.constant 0 : index
      %c0_16 = arith.constant 0 : index
      %24 = vector.load %arg6[%c0_14, %c0_15, %c0_16] : memref<1x32x1xf32, #tpu.memory_space<vmem>>, vector<1x32x1xf32>
      %25 = vector.shape_cast %24 : vector<1x32x1xf32> to vector<32x1xf32>
      %26 = vector.shape_cast %23 : vector<32x1xf32> to vector<1x32x1xf32>
      tpu.vector_store %arg6[%c0_14, %c0_15, %c0_16], %26 {strides = array<i32>} : memref<1x32x1xf32, #tpu.memory_space<vmem>>, vector<1x32x1xf32>,
    } else {
    }
    %c0 = arith.constant 0 : index
    %c0_1 = arith.constant 0 : index
    %5 = vector.load %arg3[%c0, %c0_1] : memref<32x7xbf16, #tpu.memory_space<vmem>>, vector<32x7xbf16>
    %c0_2 = arith.constant 0 : index
    %c0_3 = arith.constant 0 : index
    %6 = vector.load %arg2[%c0_2, %c0_3] : memref<7x128xbf16, #tpu.memory_space<vmem>>, vector<7x128xbf16>
    %cst = arith.constant dense<0.000000e+00> : vector<32x128xf32>
    %7 = tpu.matmul %5, %6, %cst {dimension_numbers = #tpu.dot_dimension_numbers<[1], [0], [0], [1], [0, 0, 1, 1], [], []>} : vector<32x7xbf16>, vector<7x128xbf16>, vector<32x128xf32> -> vector<32x128xf32>
    %c0_4 = arith.constant 0 : index
    %c0_5 = arith.constant 0 : index
    %8 = vector.load %arg4[%c0_4, %c0_5] : memref<32x1xf32, #tpu.memory_space<vmem>>, vector<32x1xf32>
    %9 = vector.broadcast %8 : vector<32x1xf32> to vector<32x128xf32>
    %10 = arith.addf %7, %9 : vector<32x128xf32>
    %c1_i32_6 = arith.constant 1 : i32
    %11 = arith.addi %1, %c1_i32_6 : i32
    %c128_i32 = arith.constant 128 : i32
    %12 = arith.muli %11, %c128_i32 : i32
    %c32_i32 = arith.constant 32 : i32
    %13 = arith.cmpi sgt, %12, %c32_i32 : i32
    %true = arith.constant true
    %14 = arith.xori %13, %true : i1
    %15 = arith.extui %14 : i1 to i32
    %c0_i32_7 = arith.constant 0 : i32
    %16 = arith.cmpi ne, %15, %c0_i32_7 : i32
    scf.if %16 {
      %c0_9 = arith.constant 0 : index
      %c0_10 = arith.constant 0 : index
      %c0_11 = arith.constant 0 : index
      %19 = vector.load %arg5[%c0_9, %c0_10, %c0_11] : memref<1x32x1xf32, #tpu.memory_space<vmem>>, vector<1x32x1xf32>
      %20 = vector.shape_cast %19 : vector<1x32x1xf32> to vector<32x1xf32>
      %cst_12 = arith.constant dense<0.000000e+00> : vector<32xf32>
      %21 = vector.multi_reduction <add>, %10, %cst_12 [1] : vector<32x128xf32> to vector<32xf32>
      %22 = vector.shape_cast %21 : vector<32xf32> to vector<32x1xf32>
      %23 = arith.addf %20, %22 : vector<32x1xf32>
      %c0_13 = arith.constant 0 : index
      %c0_14 = arith.constant 0 : index
      %c0_15 = arith.constant 0 : index
      %24 = vector.load %arg5[%c0_13, %c0_14, %c0_15] : memref<1x32x1xf32, #tpu.memory_space<vmem>>, vector<1x32x1xf32>
      %25 = vector.shape_cast %24 : vector<1x32x1xf32> to vector<32x1xf32>
      %26 = vector.shape_cast %23 : vector<32x1xf32> to vector<1x32x1xf32>
      tpu.vector_store %arg5[%c0_13, %c0_14, %c0_15], %26 {strides = array<i32>} : memref<1x32x1xf32, #tpu.memory_space<vmem>>, vector<1x32x1xf32>,
      %c0_16 = arith.constant 0 : index
      %c0_17 = arith.constant 0 : index
      %c0_18 = arith.constant 0 : index
      %27 = vector.load %arg6[%c0_16, %c0_17, %c0_18] : memref<1x32x1xf32, #tpu.memory_space<vmem>>, vector<1x32x1xf32>
      %28 = vector.shape_cast %27 : vector<1x32x1xf32> to vector<32x1xf32>
      %29 = arith.mulf %10, %10 : vector<32x128xf32>
      %cst_19 = arith.constant dense<0.000000e+00> : vector<32xf32>
      %30 = vector.multi_reduction <add>, %29, %cst_19 [1] : vector<32x128xf32> to vector<32xf32>
      %31 = vector.shape_cast %30 : vector<32xf32> to vector<32x1xf32>
      %32 = arith.addf %28, %31 : vector<32x1xf32>
      %c0_20 = arith.constant 0 : index
      %c0_21 = arith.constant 0 : index
      %c0_22 = arith.constant 0 : index
      %33 = vector.load %arg6[%c0_20, %c0_21, %c0_22] : memref<1x32x1xf32, #tpu.memory_space<vmem>>, vector<1x32x1xf32>
      %34 = vector.shape_cast %33 : vector<1x32x1xf32> to vector<32x1xf32>
      %35 = vector.shape_cast %32 : vector<32x1xf32> to vector<1x32x1xf32>
      tpu.vector_store %arg6[%c0_20, %c0_21, %c0_22], %35 {strides = array<i32>} : memref<1x32x1xf32, #tpu.memory_space<vmem>>, vector<1x32x1xf32>,
    } else {
    }
    %17 = arith.extui %13 : i1 to i32
    %c0_i32_8 = arith.constant 0 : i32
    %18 = arith.cmpi ne, %17, %c0_i32_8 : i32
    scf.if %18 {
      %19 = tpu.iota {dimensions = array<i32: 1>} : vector<32x128xi32>
      %c128_i32_9 = arith.constant 128 : i32
      %20 = arith.muli %1, %c128_i32_9 : i32
      %21 = vector.broadcast %20 : i32 to vector<32x128xi32>
      %22 = arith.addi %19, %21 : vector<32x128xi32>
      %c32_i32_10 = arith.constant 32 : i32
      %23 = vector.broadcast %c32_i32_10 : i32 to vector<32x128xi32>
      %24 = arith.cmpi slt, %22, %23 : vector<32x128xi32>
      %cst_11 = arith.constant 0.000000e+00 : f32
      %25 = vector.broadcast %cst_11 : f32 to vector<32x128xf32>
      %26 = arith.select %24, %10, %25 : vector<32x128xi1>, vector<32x128xf32>
      %c0_12 = arith.constant 0 : index
      %c0_13 = arith.constant 0 : index
      %c0_14 = arith.constant 0 : index
      %27 = vector.load %arg5[%c0_12, %c0_13, %c0_14] : memref<1x32x1xf32, #tpu.memory_space<vmem>>, vector<1x32x1xf32>
      %28 = vector.shape_cast %27 : vector<1x32x1xf32> to vector<32x1xf32>
      %cst_15 = arith.constant dense<0.000000e+00> : vector<32xf32>
      %29 = vector.multi_reduction <add>, %26, %cst_15 [1] : vector<32x128xf32> to vector<32xf32>
      %30 = vector.shape_cast %29 : vector<32xf32> to vector<32x1xf32>
      %31 = arith.addf %28, %30 : vector<32x1xf32>
      %c0_16 = arith.constant 0 : index
      %c0_17 = arith.constant 0 : index
      %c0_18 = arith.constant 0 : index
      %32 = vector.load %arg5[%c0_16, %c0_17, %c0_18] : memref<1x32x1xf32, #tpu.memory_space<vmem>>, vector<1x32x1xf32>
      %33 = vector.shape_cast %32 : vector<1x32x1xf32> to vector<32x1xf32>
      %34 = vector.shape_cast %31 : vector<32x1xf32> to vector<1x32x1xf32>
      tpu.vector_store %arg5[%c0_16, %c0_17, %c0_18], %34 {strides = array<i32>} : memref<1x32x1xf32, #tpu.memory_space<vmem>>, vector<1x32x1xf32>,
      %c0_19 = arith.constant 0 : index
      %c0_20 = arith.constant 0 : index
      %c0_21 = arith.constant 0 : index
      %35 = vector.load %arg6[%c0_19, %c0_20, %c0_21] : memref<1x32x1xf32, #tpu.memory_space<vmem>>, vector<1x32x1xf32>
      %36 = vector.shape_cast %35 : vector<1x32x1xf32> to vector<32x1xf32>
      %37 = arith.mulf %26, %26 : vector<32x128xf32>
      %cst_22 = arith.constant dense<0.000000e+00> : vector<32xf32>
      %38 = vector.multi_reduction <add>, %37, %cst_22 [1] : vector<32x128xf32> to vector<32xf32>
      %39 = vector.shape_cast %38 : vector<32xf32> to vector<32x1xf32>
      %40 = arith.addf %36, %39 : vector<32x1xf32>
      %c0_23 = arith.constant 0 : index
      %c0_24 = arith.constant 0 : index
      %c0_25 = arith.constant 0 : index
      %41 = vector.load %arg6[%c0_23, %c0_24, %c0_25] : memref<1x32x1xf32, #tpu.memory_space<vmem>>, vector<1x32x1xf32>
      %42 = vector.shape_cast %41 : vector<1x32x1xf32> to vector<32x1xf32>
      %43 = vector.shape_cast %40 : vector<32x1xf32> to vector<1x32x1xf32>
      tpu.vector_store %arg6[%c0_23, %c0_24, %c0_25], %43 {strides = array<i32>} : memref<1x32x1xf32, #tpu.memory_space<vmem>>, vector<1x32x1xf32>,
    } else {
    }
    return
  }
  func.func @transform_0(%arg0: i32, %arg1: i32) -> (i32, i32) {
    %c1_i32 = arith.constant 1 : i32
    %0 = arith.muli %arg0, %c1_i32 : i32
    %1 = arith.addi %0, %arg1 : i32
    %c0_i32 = arith.constant 0 : i32
    %c0_i32_0 = arith.constant 0 : i32
    return %c0_i32, %1 : i32, i32
  }
  func.func @transform_1(%arg0: i32, %arg1: i32) -> (i32, i32) {
    %c0_i32 = arith.constant 0 : i32
    %c0_i32_0 = arith.constant 0 : i32
    %c0_i32_1 = arith.constant 0 : i32
    return %c0_i32, %c0_i32_0 : i32, i32
  }
  func.func @transform_2(%arg0: i32, %arg1: i32) -> (i32, i32) {
    %c0_i32 = arith.constant 0 : i32
    %c0_i32_0 = arith.constant 0 : i32
    %c0_i32_1 = arith.constant 0 : i32
    return %c0_i32, %c0_i32_0 : i32, i32
  }
  func.func @transform_3(%arg0: i32, %arg1: i32) -> (i32, i32, i32) {
    %c0_i32 = arith.constant 0 : i32
    %c0_i32_0 = arith.constant 0 : i32
    %c0_i32_1 = arith.constant 0 : i32
    return %arg0, %c0_i32, %c0_i32_0 : i32, i32, i32
  }
  func.func @transform_4(%arg0: i32, %arg1: i32) -> (i32, i32, i32) {
    %c0_i32 = arith.constant 0 : i32
    %c0_i32_0 = arith.constant 0 : i32
    %c0_i32_1 = arith.constant 0 : i32
    return %arg0, %c0_i32, %c0_i32_0 : i32, i32, i32
  }
}

module attributes {stable_mosaic.version = 11 : i64} {
  func.func @_mlp_kernel(%arg0: i32, %arg1: memref<7x128xbf16, #tpu.memory_space<vmem>>, %arg2: memref<32x7xbf16, #tpu.memory_space<vmem>>, %arg3: memref<32x1xf32, #tpu.memory_space<vmem>>, %arg4: memref<32x1xf32, #tpu.memory_space<vmem>>, %arg5: memref<32x1xf32, #tpu.memory_space<vmem>>, %arg6: memref<2x32x32xbf16, #tpu.memory_space<vmem>>, %arg7: memref<2x32x1xf32, #tpu.memory_space<vmem>>, %arg8: memref<32x1xf32, #tpu.memory_space<vmem>>, %arg9: memref<1x1xf32, #tpu.memory_space<vmem>>, %arg10: memref<1x128xf32, #tpu.memory_space<vmem>>) attributes {dimension_semantics = [#tpu.dimension_semantics<parallel>], iteration_bounds = array<i64: 1>, scalar_prefetch = 0 : i64, scratch_operands = 0 : i64, tpu.core_type = #tpu.core_type<tc>, window_params = [{transform_indices = @transform_0, window_bounds = array<i64: 7, 128>}, {pipeline_mode = #tpu.pipeline_mode<synchronous>, transform_indices = @transform_1, window_bounds = array<i64: 32, 7>}, {pipeline_mode = #tpu.pipeline_mode<synchronous>, transform_indices = @transform_2, window_bounds = array<i64: 32, 1>}, {pipeline_mode = #tpu.pipeline_mode<synchronous>, transform_indices = @transform_3, window_bounds = array<i64: 32, 1>}, {pipeline_mode = #tpu.pipeline_mode<synchronous>, transform_indices = @transform_4, window_bounds = array<i64: 32, 1>}, {pipeline_mode = #tpu.pipeline_mode<synchronous>, transform_indices = @transform_5, window_bounds = array<i64: 2, 32, 32>}, {pipeline_mode = #tpu.pipeline_mode<synchronous>, transform_indices = @transform_6, window_bounds = array<i64: 2, 32, 1>}, {pipeline_mode = #tpu.pipeline_mode<synchronous>, transform_indices = @transform_7, window_bounds = array<i64: 32, 1>}, {pipeline_mode = #tpu.pipeline_mode<synchronous>, transform_indices = @transform_8, window_bounds = array<i64: 1, 1>}, {transform_indices = @transform_9, window_bounds = array<i64: 1, 128>}]} {
    %c0 = arith.constant 0 : index
    %c0_0 = arith.constant 0 : index
    %0 = vector.load %arg2[%c0, %c0_0] : memref<32x7xbf16, #tpu.memory_space<vmem>>, vector<32x7xbf16>
    %c0_1 = arith.constant 0 : index
    %c0_2 = arith.constant 0 : index
    %1 = vector.load %arg1[%c0_1, %c0_2] : memref<7x128xbf16, #tpu.memory_space<vmem>>, vector<7x128xbf16>
    %cst = arith.constant dense<0.000000e+00> : vector<32x128xf32>
    %2 = tpu.matmul %0, %1, %cst {dimension_numbers = #tpu.dot_dimension_numbers<[1], [0], [0], [1], [0, 0, 1, 1], [], []>} : vector<32x7xbf16>, vector<7x128xbf16>, vector<32x128xf32> -> vector<32x128xf32>
    %c0_3 = arith.constant 0 : index
    %c0_4 = arith.constant 0 : index
    %3 = vector.load %arg3[%c0_3, %c0_4] : memref<32x1xf32, #tpu.memory_space<vmem>>, vector<32x1xf32>
    %4 = vector.broadcast %3 : vector<32x1xf32> to vector<32x128xf32>
    %5 = arith.addf %2, %4 : vector<32x128xf32>
    %c0_5 = arith.constant 0 : index
    %c0_6 = arith.constant 0 : index
    %6 = vector.load %arg4[%c0_5, %c0_6] : memref<32x1xf32, #tpu.memory_space<vmem>>, vector<32x1xf32>
    %7 = vector.broadcast %6 : vector<32x1xf32> to vector<32x128xf32>
    %8 = arith.mulf %5, %7 : vector<32x128xf32>
    %c0_7 = arith.constant 0 : index
    %c0_8 = arith.constant 0 : index
    %9 = vector.load %arg5[%c0_7, %c0_8] : memref<32x1xf32, #tpu.memory_space<vmem>>, vector<32x1xf32>
    %10 = vector.broadcast %9 : vector<32x1xf32> to vector<32x128xf32>
    %11 = arith.addf %8, %10 : vector<32x128xf32>
    %c0_9 = arith.constant 0 : index
    %c0_10 = arith.constant 0 : index
    %c0_11 = arith.constant 0 : index
    %12 = vector.load %arg6[%c0_9, %c0_10, %c0_11] : memref<2x32x32xbf16, #tpu.memory_space<vmem>>, vector<1x32x32xbf16>
    %13 = vector.shape_cast %12 : vector<1x32x32xbf16> to vector<32x32xbf16>
    %14 = arith.truncf %11 : vector<32x128xf32> to vector<32x128xbf16>
    %cst_12 = arith.constant dense<0.000000e+00> : vector<32x128xf32>
    %15 = tpu.matmul %13, %14, %cst_12 {dimension_numbers = #tpu.dot_dimension_numbers<[1], [0], [0], [1], [0, 0, 1, 1], [], []>} : vector<32x32xbf16>, vector<32x128xbf16>, vector<32x128xf32> -> vector<32x128xf32>
    %c0_13 = arith.constant 0 : index
    %c0_14 = arith.constant 0 : index
    %c0_15 = arith.constant 0 : index
    %16 = vector.load %arg7[%c0_13, %c0_14, %c0_15] : memref<2x32x1xf32, #tpu.memory_space<vmem>>, vector<1x32x1xf32>
    %17 = vector.shape_cast %16 : vector<1x32x1xf32> to vector<32x1xf32>
    %18 = vector.broadcast %17 : vector<32x1xf32> to vector<32x128xf32>
    %19 = arith.addf %15, %18 : vector<32x128xf32>
    %cst_16 = arith.constant 0.000000e+00 : f32
    %20 = vector.broadcast %cst_16 : f32 to vector<32x128xf32>
    %21 = arith.maximumf %19, %20 : vector<32x128xf32>
    %c1 = arith.constant 1 : index
    %c0_17 = arith.constant 0 : index
    %c0_18 = arith.constant 0 : index
    %22 = vector.load %arg6[%c1, %c0_17, %c0_18] : memref<2x32x32xbf16, #tpu.memory_space<vmem>>, vector<1x32x32xbf16>
    %23 = vector.shape_cast %22 : vector<1x32x32xbf16> to vector<32x32xbf16>
    %24 = arith.truncf %21 : vector<32x128xf32> to vector<32x128xbf16>
    %cst_19 = arith.constant dense<0.000000e+00> : vector<32x128xf32>
    %25 = tpu.matmul %23, %24, %cst_19 {dimension_numbers = #tpu.dot_dimension_numbers<[1], [0], [0], [1], [0, 0, 1, 1], [], []>} : vector<32x32xbf16>, vector<32x128xbf16>, vector<32x128xf32> -> vector<32x128xf32>
    %c1_20 = arith.constant 1 : index
    %c0_21 = arith.constant 0 : index
    %c0_22 = arith.constant 0 : index
    %26 = vector.load %arg7[%c1_20, %c0_21, %c0_22] : memref<2x32x1xf32, #tpu.memory_space<vmem>>, vector<1x32x1xf32>
    %27 = vector.shape_cast %26 : vector<1x32x1xf32> to vector<32x1xf32>
    %28 = vector.broadcast %27 : vector<32x1xf32> to vector<32x128xf32>
    %29 = arith.addf %25, %28 : vector<32x128xf32>
    %cst_23 = arith.constant 0.000000e+00 : f32
    %30 = vector.broadcast %cst_23 : f32 to vector<32x128xf32>
    %31 = arith.maximumf %29, %30 : vector<32x128xf32>
    %c0_24 = arith.constant 0 : index
    %c0_25 = arith.constant 0 : index
    %32 = vector.load %arg8[%c0_24, %c0_25] : memref<32x1xf32, #tpu.memory_space<vmem>>, vector<32x1xf32>
    %33 = vector.broadcast %32 : vector<32x1xf32> to vector<32x128xf32>
    %34 = arith.mulf %31, %33 : vector<32x128xf32>
    %cst_26 = arith.constant dense<0.000000e+00> : vector<128xf32>
    %35 = vector.multi_reduction <add>, %34, %cst_26 [0] : vector<32x128xf32> to vector<128xf32>
    %36 = vector.shape_cast %35 : vector<128xf32> to vector<1x128xf32>
    %c0_27 = arith.constant 0 : index
    %c0_28 = arith.constant 0 : index
    %37 = vector.load %arg9[%c0_27, %c0_28] : memref<1x1xf32, #tpu.memory_space<vmem>>, vector<1x1xf32>
    %38 = vector.broadcast %37 : vector<1x1xf32> to vector<1x128xf32>
    %39 = arith.addf %36, %38 : vector<1x128xf32>
    %c0_29 = arith.constant 0 : index
    %c0_30 = arith.constant 0 : index
    %40 = vector.load %arg10[%c0_29, %c0_30] : memref<1x128xf32, #tpu.memory_space<vmem>>, vector<1x128xf32>
    tpu.vector_store %arg10[%c0_29, %c0_30], %39 {strides = array<i32>} : memref<1x128xf32, #tpu.memory_space<vmem>>, vector<1x128xf32>,
    return
  }
  func.func @transform_0(%arg0: i32) -> (i32, i32) {
    %c0_i32 = arith.constant 0 : i32
    %c0_i32_0 = arith.constant 0 : i32
    return %c0_i32, %arg0 : i32, i32
  }
  func.func @transform_1(%arg0: i32) -> (i32, i32) {
    %c0_i32 = arith.constant 0 : i32
    %c0_i32_0 = arith.constant 0 : i32
    %c0_i32_1 = arith.constant 0 : i32
    return %c0_i32, %c0_i32_0 : i32, i32
  }
  func.func @transform_2(%arg0: i32) -> (i32, i32) {
    %c0_i32 = arith.constant 0 : i32
    %c0_i32_0 = arith.constant 0 : i32
    %c0_i32_1 = arith.constant 0 : i32
    return %c0_i32, %c0_i32_0 : i32, i32
  }
  func.func @transform_3(%arg0: i32) -> (i32, i32) {
    %c0_i32 = arith.constant 0 : i32
    %c0_i32_0 = arith.constant 0 : i32
    %c0_i32_1 = arith.constant 0 : i32
    return %c0_i32, %c0_i32_0 : i32, i32
  }
  func.func @transform_4(%arg0: i32) -> (i32, i32) {
    %c0_i32 = arith.constant 0 : i32
    %c0_i32_0 = arith.constant 0 : i32
    %c0_i32_1 = arith.constant 0 : i32
    return %c0_i32, %c0_i32_0 : i32, i32
  }
  func.func @transform_5(%arg0: i32) -> (i32, i32, i32) {
    %c0_i32 = arith.constant 0 : i32
    %c0_i32_0 = arith.constant 0 : i32
    %c0_i32_1 = arith.constant 0 : i32
    %c0_i32_2 = arith.constant 0 : i32
    return %c0_i32, %c0_i32_0, %c0_i32_1 : i32, i32, i32
  }
  func.func @transform_6(%arg0: i32) -> (i32, i32, i32) {
    %c0_i32 = arith.constant 0 : i32
    %c0_i32_0 = arith.constant 0 : i32
    %c0_i32_1 = arith.constant 0 : i32
    %c0_i32_2 = arith.constant 0 : i32
    return %c0_i32, %c0_i32_0, %c0_i32_1 : i32, i32, i32
  }
  func.func @transform_7(%arg0: i32) -> (i32, i32) {
    %c0_i32 = arith.constant 0 : i32
    %c0_i32_0 = arith.constant 0 : i32
    %c0_i32_1 = arith.constant 0 : i32
    return %c0_i32, %c0_i32_0 : i32, i32
  }
  func.func @transform_8(%arg0: i32) -> (i32, i32) {
    %c0_i32 = arith.constant 0 : i32
    %c0_i32_0 = arith.constant 0 : i32
    %c0_i32_1 = arith.constant 0 : i32
    return %c0_i32, %c0_i32_0 : i32, i32
  }
  func.func @transform_9(%arg0: i32) -> (i32, i32) {
    %c0_i32 = arith.constant 0 : i32
    %c0_i32_0 = arith.constant 0 : i32
    return %c0_i32, %arg0 : i32, i32
  }
}

</mosaic_0001>

<llo_original>
// kernel: cnn_forward.2
$region0: #{cnn_forward.2}
  #allocation0 [shape = 'u32[]', space=smem, size = 0x4, offset = 0x4, fixed_abs, tag = 'smem constant byte address 0x4 - core index']
  #allocation1 [shape = 'u32[144,128]{1,0:T(1,128)}', space=vmem, size = 0x12000, scoped, tag = 'internal scratch']
  %s0 = inlined_call_operand.vmem [shape: bf16[7,256], index: 0, kind: input, shape index: {}]
  %s1 = inlined_call_operand.vmem [shape: bf16[32,7], index: 1, kind: input, shape index: {}]
  %s2 = inlined_call_operand.vmem [shape: f32[32,1], index: 2, kind: input, shape index: {}]
  %s3 = inlined_call_operand.vmem [shape: f32[2,32,1], index: 3, kind: output, shape index: {0}]
  %s4 = inlined_call_operand.vmem [shape: f32[2,32,1], index: 4, kind: output, shape index: {1}]
  %5 = xla_tuple %s3, %s4
  %s6 = sld [smem:[#allocation0]]
  $region65: #{cnn_forward.2} parent=0
    _
  %s8 = ssub.s32 1, %s6
  %s9 = scalar_select 0, %s8, %s6
  loop: start=0, step=1, limit=4
  $region2: #{cnn_forward.2} parent=0 // loop_pre_header
    _
  $region3: #{cnn_forward.2} parent=0 // loop_header
    %s11 = sphi 0, %s15
    %p12 = scmp.ge.s32.totalorder %s11, 4
    %s18 = sphi 0, %s30
    %s19 = sphi 0, %s26
    %s20 = sphi 0, %s18
    %s21 = sphi 0, %s19
    %s22 = sphi 0, %s20
    %s23 = sphi 0, %s21
    %s35 = sphi 0, %s37
    %s38 = sphi 0, %s35
    %s39 = sphi 0, %s38
    %s55 = sphi 0, %s39
    %s59 = sphi 0, %s59
    %s61 = sphi 0, %s59
    %s62 = sphi 0, %s61
    %s76 = sphi 0, %s62
    %s80 = sphi 0, %s80
    %s82 = sphi 0, %s80
    %s83 = sphi 0, %s82
    %s97 = sphi 0, %s83
    %s103 = sphi 0, %s105
    %s106 = sphi 0, %s103
    %s107 = sphi 0, %s106
    %s123 = sphi 0, %s107
    %s129 = sphi 0, %s131
    %s132 = sphi 0, %s129
    %s133 = sphi 0, %s132
    %s149 = sphi 0, %s133
  $region4: #{cnn_forward.2} parent=0 // loop_header_branch
    %14 = sbr.rel (%p12) target = $region8
  $region5: #{cnn_forward.2} parent=0 // loop_body
    %s16 = ssub.s32 %s11, 1
    %s17 = ssub.s32 %s11, 2
    %s24 = sadd.s32 1, %s19
    %p25 = scmp.ge.s32.totalorder %s24, 1
    %s26 = scalar_select %p25, 0, %s24
    %s27 = sadd.s32 1, %s18
    %s28 = scalar_select %p25, %s27, %s18
    %p29 = scmp.ge.s32.totalorder %s28, 2
    %s30 = scalar_select %p29, 0, %s28
    %s31 = sadd.s32 %s18, %s19
    %s32 = sadd.s32 %s30, %s26
    %s33 = ssub.s32 %s31, %s32
    %p34 = scmp.eq.s32.totalorder %s33, 0
    %s36 = sadd.s32 %s35, 1
    %s37 = scalar_select %p34, %s35, %s36
    %p40 = pneg %p34
    %p41 = scmp.eq.s32.totalorder %s11, 1
    %p42 = por %p40, %p41
    %p43 = scmp.ne.s32.totalorder %s35, %s38
    %p44 = scmp.eq.s32.totalorder %s11, 0
    %p45 = por %p43, %p44
    %p46 = scmp.ne.s32.totalorder %s35, %s38
    %p47 = scmp.eq.s32.totalorder %s16, 1
    %p48 = por %p46, %p47
    %p49 = scmp.ne.s32.totalorder %s38, %s39
    %p50 = scmp.eq.s32.totalorder %s16, 0
    %p51 = por %p49, %p50
    %p52 = scmp.ne.s32.totalorder %s38, %s39
    %p53 = scmp.eq.s32.totalorder %s17, 1
    %p54 = por %p52, %p53
    %p56 = scmp.ne.s32.totalorder %s39, %s55
    %p57 = scmp.eq.s32.totalorder %s17, 0
    %p58 = por %p56, %p57
    %s60 = sadd.s32 %s59, 1
    %p63 = scmp.eq.s32.totalorder %s11, 1
    %p64 = scmp.ne.s32.totalorder %s59, %s61
    %p65 = scmp.eq.s32.totalorder %s11, 0
    %p66 = por %p64, %p65
    %p67 = scmp.ne.s32.totalorder %s59, %s61
    %p68 = scmp.eq.s32.totalorder %s16, 1
    %p69 = por %p67, %p68
    %p70 = scmp.ne.s32.totalorder %s61, %s62
    %p71 = scmp.eq.s32.totalorder %s16, 0
    %p72 = por %p70, %p71
    %p73 = scmp.ne.s32.totalorder %s61, %s62
    %p74 = scmp.eq.s32.totalorder %s17, 1
    %p75 = por %p73, %p74
    %p77 = scmp.ne.s32.totalorder %s62, %s76
    %p78 = scmp.eq.s32.totalorder %s17, 0
    %p79 = por %p77, %p78
    %s81 = sadd.s32 %s80, 1
    %p84 = scmp.eq.s32.totalorder %s11, 1
    %p85 = scmp.ne.s32.totalorder %s80, %s82
    %p86 = scmp.eq.s32.totalorder %s11, 0
    %p87 = por %p85, %p86
    %p88 = scmp.ne.s32.totalorder %s80, %s82
    %p89 = scmp.eq.s32.totalorder %s16, 1
    %p90 = por %p88, %p89
    %p91 = scmp.ne.s32.totalorder %s82, %s83
    %p92 = scmp.eq.s32.totalorder %s16, 0
    %p93 = por %p91, %p92
    %p94 = scmp.ne.s32.totalorder %s82, %s83
    %p95 = scmp.eq.s32.totalorder %s17, 1
    %p96 = por %p94, %p95
    %p98 = scmp.ne.s32.totalorder %s83, %s97
    %p99 = scmp.eq.s32.totalorder %s17, 0
    %p100 = por %p98, %p99
    %s101 = ssub.s32 %s18, %s30
    %p102 = scmp.eq.s32.totalorder %s101, 0
    %s104 = sadd.s32 %s103, 1
    %s105 = scalar_select %p102, %s103, %s104
    %p108 = pneg %p102
    %p109 = scmp.eq.s32.totalorder %s11, 1
    %p110 = por %p108, %p109
    %p111 = scmp.ne.s32.totalorder %s103, %s106
    %p112 = scmp.eq.s32.totalorder %s11, 0
    %p113 = por %p111, %p112
    %p114 = scmp.ne.s32.totalorder %s103, %s106
    %p115 = scmp.eq.s32.totalorder %s16, 1
    %p116 = por %p114, %p115
    %p117 = scmp.ne.s32.totalorder %s106, %s107
    %p118 = scmp.eq.s32.totalorder %s16, 0
    %p119 = por %p117, %p118
    %p120 = scmp.ne.s32.totalorder %s106, %s107
    %p121 = scmp.eq.s32.totalorder %s17, 1
    %p122 = por %p120, %p121
    %p124 = scmp.ne.s32.totalorder %s107, %s123
    %p125 = scmp.eq.s32.totalorder %s17, 0
    %p126 = por %p124, %p125
    %s127 = ssub.s32 %s18, %s30
    %p128 = scmp.eq.s32.totalorder %s127, 0
    %s130 = sadd.s32 %s129, 1
    %s131 = scalar_select %p128, %s129, %s130
    %p134 = pneg %p128
    %p135 = scmp.eq.s32.totalorder %s11, 1
    %p136 = por %p134, %p135
    %p137 = scmp.ne.s32.totalorder %s129, %s132
    %p138 = scmp.eq.s32.totalorder %s11, 0
    %p139 = por %p137, %p138
    %p140 = scmp.ne.s32.totalorder %s129, %s132
    %p141 = scmp.eq.s32.totalorder %s16, 1
    %p142 = por %p140, %p141
    %p143 = scmp.ne.s32.totalorder %s132, %s133
    %p144 = scmp.eq.s32.totalorder %s16, 0
    %p145 = por %p143, %p144
    %p146 = scmp.ne.s32.totalorder %s132, %s133
    %p147 = scmp.eq.s32.totalorder %s17, 1
    %p148 = por %p146, %p147
    %p150 = scmp.ne.s32.totalorder %s133, %s149
    %p151 = scmp.eq.s32.totalorder %s17, 0
    %p152 = por %p150, %p151
    %p153 = scmp.le.s32.totalorder 1, %s11
    %p154 = scmp.lt.s32.totalorder %s11, 3
    %p155 = pnand %p153, %p154
    %p156 = pneg %p155
    // Predicated region
    $region9: #{cnn_forward.2} parent=5 // pred_check
      _
    $region10: #{cnn_forward.2} parent=5 // pred_check_branch
      %158 = sbr.rel (%p155) target = $region12
    $region11: #{cnn_forward.2} parent=5 // pred_region
      %s159 = ssub.s32 %s11, 1
      // Predicated region
      $region13: #{cnn_forward.2} parent=11 // pred_check
        %p160 = pneg %p72
      $region14: #{cnn_forward.2} parent=11 // pred_check_branch
        %162 = sbr.rel (%p160) target = $region16
      $region15: #{cnn_forward.2} parent=11 // pred_region
        _
      $region16: #{cnn_forward.2} parent=11 // pred_fallthru
        _
      // Predicated region
      $region17: #{cnn_forward.2} parent=11 // pred_check
        %p163 = pneg %p93
      $region18: #{cnn_forward.2} parent=11 // pred_check_branch
        %165 = sbr.rel (%p163) target = $region20
      $region19: #{cnn_forward.2} parent=11 // pred_region
        _
      $region20: #{cnn_forward.2} parent=11 // pred_fallthru
        _
    $region12: #{cnn_forward.2} parent=5 // pred_fallthru
      _
    %p166 = scmp.lt.s32.totalorder %s11, 2
    // Predicated region
    $region21: #{cnn_forward.2} parent=5 // pred_check
      %p167 = pneg %p166
    $region22: #{cnn_forward.2} parent=5 // pred_check_branch
      %169 = sbr.rel (%p167) target = $region24
    $region23: #{cnn_forward.2} parent=5 // pred_region
      // Predicated region
      $region25: #{cnn_forward.2} parent=23 // pred_check
        %p170 = pneg %p45
      $region26: #{cnn_forward.2} parent=23 // pred_check_branch
        %172 = sbr.rel (%p170) target = $region28
      $region27: #{cnn_forward.2} parent=23 // pred_region
        %s173 = sadd.s32 %s18, %s19
        %p174 = scmp.lt.s32.totalorder %s173, 1
        %s175 = scalar_select %p174, %s173, 1
        %s176 = smul.addr %s175, 4
        %s177 = scalar_lea.vmem %s0, %s176
        %s178 = sadd.s32 %s18, %s19
      $region28: #{cnn_forward.2} parent=23 // pred_fallthru
        _
    $region24: #{cnn_forward.2} parent=5 // pred_fallthru
      _
    %p179 = scmp.le.s32.totalorder 1, %s11
    %p180 = scmp.lt.s32.totalorder %s11, 3
    %p181 = pnand %p179, %p180
    %p182 = pneg %p181
    // Predicated region
    $region29: #{cnn_forward.2} parent=5 // pred_check
      _
    $region30: #{cnn_forward.2} parent=5 // pred_check_branch
      %184 = sbr.rel (%p181) target = $region32
    $region31: #{cnn_forward.2} parent=5 // pred_region
      %s185 = ssub.s32 %s11, 1
      %s186 = sadd.s32 %s20, %s21
      %p187 = scmp.lt.s32.totalorder %s186, 1
      %s188 = scalar_select %p187, %s186, 1
      %s189 = smul.addr %s188, 4
      %s190 = scalar_lea.vmem %s0, %s189
      %p191 = pneg %p51
      %p192 = pneg %p48
      %p193 = pneg %p72
      %p194 = pneg %p69
      %p195 = pneg %p93
      %p196 = pneg %p90
      %p197 = pneg %p119
      %p198 = pneg %p116
      %p199 = scmp.lt.s32.totalorder %s20, 1
      %s200 = scalar_select %p199, %s20, 1
      %s201 = smul.addr %s200, 4
      %s202 = smul.addr %s201, 8
      %s203 = scalar_lea.vmem %s3, %s202
      %p204 = pneg %p145
      %p205 = pneg %p142
      %p206 = scmp.lt.s32.totalorder %s20, 1
      %s207 = scalar_select %p206, %s20, 1
      %s208 = smul.addr %s207, 4
      %s209 = smul.addr %s208, 8
      %s210 = scalar_lea.vmem %s4, %s209
      %s211 = sadd.s32 %s20, %s21
      %p212 = scmp.lt.s32.totalorder %s211, 1
      %s213 = scalar_select %p212, %s211, 1
      %s214 = smul.addr %s213, 4
      %s215 = scalar_lea.vmem %s0, %s214
      %s216 = sadd.s32 %s20, %s21
      %p217 = scmp.lt.s32.totalorder %s20, 1
      %s218 = scalar_select %p217, %s20, 1
      %s219 = smul.addr %s218, 4
      %s220 = smul.addr %s219, 8
      %s221 = scalar_lea.vmem %s3, %s220
      %p222 = scmp.lt.s32.totalorder %s20, 1
      %s223 = scalar_select %p222, %s20, 1
      %s224 = smul.addr %s223, 4
      %s225 = smul.addr %s224, 8
      %s226 = scalar_lea.vmem %s4, %s225
      %s228 = sadd.s32 %s20, %s21
      %p229 = scmp.eq.s32.totalorder %s21, 0
      // Predicated region
      $region33: #{cnn_forward.2} parent=31 // pred_check
        %p230 = pneg %p229
      $region34: #{cnn_forward.2} parent=31 // pred_check_branch
        %232 = sbr.rel (%p230) target = $region36
      $region35: #{cnn_forward.2} parent=31 // pred_region
        %vm233 = vcmask 7168
        %234 = vst.msk [vmem:[%s221] sm:$0xff] %vm233, 0.0
        %235 = vst.msk [vmem:[%s221 + $0x8] sm:$0xff] %vm233, 0.0
        %236 = vst.msk [vmem:[%s221 + $0x10] sm:$0xff] %vm233, 0.0
        %237 = vst.msk [vmem:[%s221 + $0x18] sm:$0xff] %vm233, 0.0
        %238 = vst.msk [vmem:[%s226] sm:$0xff] %vm233, 0.0
        %239 = vst.msk [vmem:[%s226 + $0x8] sm:$0xff] %vm233, 0.0
        %240 = vst.msk [vmem:[%s226 + $0x10] sm:$0xff] %vm233, 0.0
        %241 = vst.msk [vmem:[%s226 + $0x18] sm:$0xff] %vm233, 0.0
      $region36: #{cnn_forward.2} parent=31 // pred_fallthru
        _
      %v242 = vld [vmem:[%s1] sm:$0xf]
      %v243 = vld [vmem:[%s1 + $0x4] sm:$0xf]
      %v244 = vld [vmem:[%s1 + $0x8] sm:$0xf]
      %v245 = vld [vmem:[%s1 + $0xc] sm:$0xf]
      %v246 = vld [vmem:[%s215] sm:$0xf]
      %v247 = vld [vmem:[%s2] sm:$0xff]
      %v248 = vld [vmem:[%s2 + $0x8] sm:$0xff]
      %v249 = vld [vmem:[%s2 + $0x10] sm:$0xff]
      %v250 = vld [vmem:[%s2 + $0x18] sm:$0xff]
      %252 = vset.pattern.permute.xlu0 0
      %253 = vperm.xlu0 %252, %v247
      %v254 = vpop.permute.xlu0 %253
      %257 = vset.pattern.permute.xlu0 0
      %258 = vperm.xlu0 %257, %v248
      %v259 = vpop.permute.xlu0 %258
      %262 = vset.pattern.permute.xlu0 0
      %263 = vperm.xlu0 %262, %v249
      %v264 = vpop.permute.xlu0 %263
      %267 = vset.pattern.permute.xlu0 0
      %268 = vperm.xlu0 %267, %v250
      %v269 = vpop.permute.xlu0 %268
      %v275 = vunpack.c.l.b16 %v242
      %v276 = vunpack.c.l.b16 %v243
      %v277 = vunpack.c.l.b16 %v244
      %v278 = vunpack.c.l.b16 %v245
      %v279 = vpack.c.b16 %v276, %v275
      %v280 = vpack.c.b16 %v278, %v277
      %vm281 = vcmask 56320
      %v283 = vsel %vm281, %v279, 0
      %v286 = vsel %vm281, %v280, 0
      %vm288 = vcmask 1042432
      %vm289 = vcmask 1043456
      %v290 = vsel %vm288, 4294967295, 65535
      %v291 = vsel %vm289, %v290, 0
      %v293 = vand.u32 %v246, %v291
      %295 = vmatprep.subr.bf16.mxu0 0
      %296 = vmatpush1.bf16.msra.mxu0 %v293
      %297 = vmatprep.subr.bf16.mxu0 0
      %298 = vmatpush1.bf16.msra.mxu0 0
      %299 = vmatprep.subr.bf16.mxu0 0
      %300 = vmatpush1.bf16.msra.mxu0 0
      %301 = vmatprep.subr.bf16.mxu0 0
      %302 = vmatpush1.bf16.msra.mxu0 0
      %303 = vmatprep.subr.bf16.mxu0 0
      %304 = vmatpush1.bf16.msra.mxu0 0
      %305 = vmatprep.subr.bf16.mxu0 0
      %306 = vmatpush1.bf16.msra.mxu0 0
      %307 = vmatprep.subr.bf16.mxu0 0
      %308 = vmatpush1.bf16.msra.mxu0 0
      %309 = vmatprep.subr.bf16.mxu0 0
      %310 = vmatpush1.bf16.msra.mxu0 0
      %311 = vmatprep.subr.bf16.mxu0 0
      %312 = vmatpush1.bf16.msra.mxu0 0
      %313 = vmatprep.subr.bf16.mxu0 0
      %314 = vmatpush1.bf16.msra.mxu0 0
      %315 = vmatprep.subr.bf16.mxu0 0
      %316 = vmatpush1.bf16.msra.mxu0 0
      %317 = vmatprep.subr.bf16.mxu0 0
      %318 = vmatpush1.bf16.msra.mxu0 0
      %319 = vmatprep.subr.bf16.mxu0 0
      %320 = vmatpush1.bf16.msra.mxu0 0
      %321 = vmatprep.subr.bf16.mxu0 0
      %322 = vmatpush1.bf16.msra.mxu0 0
      %323 = vmatprep.subr.bf16.mxu0 0
      %324 = vmatpush1.bf16.msra.mxu0 0
      %325 = vmatprep.subr.bf16.mxu0 0
      %326 = vmatpush1.bf16.msra.mxu0 0
      %327 = vmatprep.mubr.bf16.mxu0 0
      %328 = vmatmul.mubr.bf16.gmra.mrb[0].mxu0 %v283
      %v329 = vpop.f32.mrb[0].mxu0
      %v330 = vadd.f32 %v254, %v329
      %v331 = vpop.f32.mrb[0].mxu0
      %v332 = vpop.f32.mrb[0].mxu0
      %v333 = vadd.f32 %v259, %v332
      %v334 = vpop.f32.mrb[0].mxu0
      %335 = vmatprep.mubr.bf16.mxu0 0
      %336 = vmatmul.mubr.bf16.gmra.mrb[0].mxu0 %v286
      %v337 = vpop.f32.mrb[0].mxu0
      %v338 = vadd.f32 %v264, %v337
      %v339 = vpop.f32.mrb[0].mxu0
      %v340 = vpop.f32.mrb[0].mxu0
      %v341 = vadd.f32 %v269, %v340
      %v342 = vpop.f32.mrb[0].mxu0
      %343 = vdwg.mxu0
      %s344 = sadd.s32 %s228, 1
      %s345 = smul.u32 %s344, 128
      %p346 = scmp.gt.s32.totalorder %s345, 32
      %p347 = scmp.le.s32.totalorder %s345, 32
      // Predicated region
      $region37: #{cnn_forward.2} parent=31 // pred_check
        %p348 = pneg %p347
      $region38: #{cnn_forward.2} parent=31 // pred_check_branch
        %350 = sbr.rel (%p348) target = $region40
      $region39: #{cnn_forward.2} parent=31 // pred_region
        %v351 = vld [vmem:[%s221] sm:$0xff]
        %v352 = vld [vmem:[%s221 + $0x8] sm:$0xff]
        %v353 = vld [vmem:[%s221 + $0x10] sm:$0xff]
        %v354 = vld [vmem:[%s221 + $0x18] sm:$0xff]
        %355 = vadd.xlane.f32.xlu0 %v330
        %v356 = vpop.xlane.xlu0 %355
        %357 = vadd.xlane.f32.xlu0 %v333
        %v358 = vpop.xlane.xlu0 %357
        %359 = vadd.xlane.f32.xlu0 %v338
        %v360 = vpop.xlane.xlu0 %359
        %361 = vadd.xlane.f32.xlu0 %v341
        %v362 = vpop.xlane.xlu0 %361
        %v363 = vadd.f32 %v351, %v356
        %v364 = vadd.f32 %v352, %v358
        %v365 = vadd.f32 %v353, %v360
        %v366 = vadd.f32 %v354, %v362
        %vm367 = vcmask 7168
        %368 = vst.msk [vmem:[%s221] sm:$0xff] %vm367, %v363
        %369 = vst.msk [vmem:[%s221 + $0x8] sm:$0xff] %vm367, %v364
        %370 = vst.msk [vmem:[%s221 + $0x10] sm:$0xff] %vm367, %v365
        %371 = vst.msk [vmem:[%s221 + $0x18] sm:$0xff] %vm367, %v366
        %v372 = vld [vmem:[%s226] sm:$0xff]
        %v373 = vld [vmem:[%s226 + $0x8] sm:$0xff]
        %v374 = vld [vmem:[%s226 + $0x10] sm:$0xff]
        %v375 = vld [vmem:[%s226 + $0x18] sm:$0xff]
        %v376 = vmul.f32 %v330, %v330
        %v377 = vmul.f32 %v333, %v333
        %v378 = vmul.f32 %v338, %v338
        %v379 = vmul.f32 %v341, %v341
        %380 = vadd.xlane.f32.xlu0 %v376
        %v381 = vpop.xlane.xlu0 %380
        %382 = vadd.xlane.f32.xlu0 %v377
        %v383 = vpop.xlane.xlu0 %382
        %384 = vadd.xlane.f32.xlu0 %v378
        %v385 = vpop.xlane.xlu0 %384
        %386 = vadd.xlane.f32.xlu0 %v379
        %v387 = vpop.xlane.xlu0 %386
        %v388 = vadd.f32 %v372, %v381
        %v389 = vadd.f32 %v373, %v383
        %v390 = vadd.f32 %v374, %v385
        %v391 = vadd.f32 %v375, %v387
        %392 = vst.msk [vmem:[%s226] sm:$0xff] %vm367, %v388
        %393 = vst.msk [vmem:[%s226 + $0x8] sm:$0xff] %vm367, %v389
        %394 = vst.msk [vmem:[%s226 + $0x10] sm:$0xff] %vm367, %v390
        %395 = vst.msk [vmem:[%s226 + $0x18] sm:$0xff] %vm367, %v391
      $region40: #{cnn_forward.2} parent=31 // pred_fallthru
        _
      // Predicated region
      $region41: #{cnn_forward.2} parent=31 // pred_check
        %p396 = pneg %p346
      $region42: #{cnn_forward.2} parent=31 // pred_check_branch
        %398 = sbr.rel (%p396) target = $region44
      $region43: #{cnn_forward.2} parent=31 // pred_region
        %v399 = vlaneseq
        %v400 = vand.u32 %v399, 127
        %s401 = smul.u32 %s228, 128
        %v402 = vstv %s401
        %v403 = vadd.s32 %v400, %v402
        %vm404 = vcmp.lt.s32.totalorder %v403, 32
        %v405 = vsel %vm404, %v330, 0.0
        %v406 = vsel %vm404, %v333, 0.0
        %v407 = vsel %vm404, %v338, 0.0
        %v408 = vsel %vm404, %v341, 0.0
        %v409 = vld [vmem:[%s221] sm:$0xff]
        %v410 = vld [vmem:[%s221 + $0x8] sm:$0xff]
        %v411 = vld [vmem:[%s221 + $0x10] sm:$0xff]
        %v412 = vld [vmem:[%s221 + $0x18] sm:$0xff]
        %413 = vadd.xlane.f32.xlu0 %v405
        %v414 = vpop.xlane.xlu0 %413
        %415 = vadd.xlane.f32.xlu0 %v406
        %v416 = vpop.xlane.xlu0 %415
        %417 = vadd.xlane.f32.xlu0 %v407
        %v418 = vpop.xlane.xlu0 %417
        %419 = vadd.xlane.f32.xlu0 %v408
        %v420 = vpop.xlane.xlu0 %419
        %v421 = vadd.f32 %v409, %v414
        %v422 = vadd.f32 %v410, %v416
        %v423 = vadd.f32 %v411, %v418
        %v424 = vadd.f32 %v412, %v420
        %vm425 = vcmask 7168
        %426 = vst.msk [vmem:[%s221] sm:$0xff] %vm425, %v421
        %427 = vst.msk [vmem:[%s221 + $0x8] sm:$0xff] %vm425, %v422
        %428 = vst.msk [vmem:[%s221 + $0x10] sm:$0xff] %vm425, %v423
        %429 = vst.msk [vmem:[%s221 + $0x18] sm:$0xff] %vm425, %v424
        %v430 = vld [vmem:[%s226] sm:$0xff]
        %v431 = vld [vmem:[%s226 + $0x8] sm:$0xff]
        %v432 = vld [vmem:[%s226 + $0x10] sm:$0xff]
        %v433 = vld [vmem:[%s226 + $0x18] sm:$0xff]
        %v434 = vmul.f32 %v405, %v405
        %v435 = vmul.f32 %v406, %v406
        %v436 = vmul.f32 %v407, %v407
        %v437 = vmul.f32 %v408, %v408
        %438 = vadd.xlane.f32.xlu0 %v434
        %v439 = vpop.xlane.xlu0 %438
        %440 = vadd.xlane.f32.xlu0 %v435
        %v441 = vpop.xlane.xlu0 %440
        %442 = vadd.xlane.f32.xlu0 %v436
        %v443 = vpop.xlane.xlu0 %442
        %444 = vadd.xlane.f32.xlu0 %v437
        %v445 = vpop.xlane.xlu0 %444
        %v446 = vadd.f32 %v430, %v439
        %v447 = vadd.f32 %v431, %v441
        %v448 = vadd.f32 %v432, %v443
        %v449 = vadd.f32 %v433, %v445
        %450 = vst.msk [vmem:[%s226] sm:$0xff] %vm425, %v446
        %451 = vst.msk [vmem:[%s226 + $0x8] sm:$0xff] %vm425, %v447
        %452 = vst.msk [vmem:[%s226 + $0x10] sm:$0xff] %vm425, %v448
        %453 = vst.msk [vmem:[%s226 + $0x18] sm:$0xff] %vm425, %v449
      $region44: #{cnn_forward.2} parent=31 // pred_fallthru
        _
      %p454 = scmp.lt.s32.totalorder %s20, 1
      %s455 = scalar_select %p454, %s20, 1
      %s456 = smul.addr %s455, 4
      %s457 = smul.addr %s456, 8
      %s458 = scalar_lea.vmem %s3, %s457
      %p459 = scmp.lt.s32.totalorder %s20, 1
      %s460 = scalar_select %p459, %s20, 1
      %s461 = smul.addr %s460, 4
      %s462 = smul.addr %s461, 8
      %s463 = scalar_lea.vmem %s4, %s462
      // Predicated region
      $region45: #{cnn_forward.2} parent=31 // pred_check
        %p464 = pneg %p116
      $region46: #{cnn_forward.2} parent=31 // pred_check_branch
        %466 = sbr.rel (%p464) target = $region48
      $region47: #{cnn_forward.2} parent=31 // pred_region
        _
      $region48: #{cnn_forward.2} parent=31 // pred_fallthru
        _
      // Predicated region
      $region49: #{cnn_forward.2} parent=31 // pred_check
        %p467 = pneg %p142
      $region50: #{cnn_forward.2} parent=31 // pred_check_branch
        %469 = sbr.rel (%p467) target = $region52
      $region51: #{cnn_forward.2} parent=31 // pred_region
        _
      $region52: #{cnn_forward.2} parent=31 // pred_fallthru
        _
    $region32: #{cnn_forward.2} parent=5 // pred_fallthru
      _
    %p470 = scmp.le.s32.totalorder 2, %s11
    // Predicated region
    $region53: #{cnn_forward.2} parent=5 // pred_check
      %p471 = pneg %p470
    $region54: #{cnn_forward.2} parent=5 // pred_check_branch
      %473 = sbr.rel (%p471) target = $region56
    $region55: #{cnn_forward.2} parent=5 // pred_region
      %s474 = ssub.s32 %s11, 2
      // Predicated region
      $region57: #{cnn_forward.2} parent=55 // pred_check
        %p475 = pneg %p122
      $region58: #{cnn_forward.2} parent=55 // pred_check_branch
        %477 = sbr.rel (%p475) target = $region60
      $region59: #{cnn_forward.2} parent=55 // pred_region
        %p478 = scmp.lt.s32.totalorder %s22, 1
        %s479 = scalar_select %p478, %s22, 1
        %s480 = smul.addr %s479, 4
        %s481 = smul.addr %s480, 8
        %s482 = scalar_lea.vmem %s3, %s481
      $region60: #{cnn_forward.2} parent=55 // pred_fallthru
        _
      // Predicated region
      $region61: #{cnn_forward.2} parent=55 // pred_check
        %p483 = pneg %p148
      $region62: #{cnn_forward.2} parent=55 // pred_check_branch
        %485 = sbr.rel (%p483) target = $region64
      $region63: #{cnn_forward.2} parent=55 // pred_region
        %p486 = scmp.lt.s32.totalorder %s22, 1
        %s487 = scalar_select %p486, %s22, 1
        %s488 = smul.addr %s487, 4
        %s489 = smul.addr %s488, 8
        %s490 = scalar_lea.vmem %s4, %s489
      $region64: #{cnn_forward.2} parent=55 // pred_fallthru
        _
    $region56: #{cnn_forward.2} parent=5 // pred_fallthru
      _
  $region6: #{cnn_forward.2} parent=0 // loop_footer
    %s15 = sadd.s32 1, %s11
  $region7: #{cnn_forward.2} parent=0 // loop_footer_branch
    %10 = sbr.rel target = $region3
  $region8: #{cnn_forward.2} parent=0 // loop_exit
    _

// kernel: cnn_forward.3
$region0: #{cnn_forward.3}
  #allocation0 [shape = 'u32[]', space=smem, size = 0x4, offset = 0x4, fixed_abs, tag = 'smem constant byte address 0x4 - core index']
  #allocation1 [shape = 'u32[144,128]{1,0:T(1,128)}', space=vmem, size = 0x12000, scoped, tag = 'internal scratch']
  #allocation2 [shape = 'f32[1,1]{1,0:T(1,128)S(1)}', space=vmem, size = 0x200, scoped, tag = 'scoped memory for cnn_forward.3']
  %s0 = inlined_call_operand.vmem [shape: bf16[7,256], index: 0, kind: input, shape index: {}]
  %s1 = inlined_call_operand.vmem [shape: bf16[32,7], index: 1, kind: input, shape index: {}]
  %s2 = inlined_call_operand.vmem [shape: f32[32,1], index: 2, kind: input, shape index: {}]
  %s3 = inlined_call_operand.vmem [shape: f32[32,1], index: 3, kind: input, shape index: {}]
  %s4 = inlined_call_operand.vmem [shape: f32[32,1], index: 4, kind: input, shape index: {}]
  %s5 = inlined_call_operand.vmem [shape: bf16[2,32,32], index: 5, kind: input, shape index: {}]
  %s6 = inlined_call_operand.vmem [shape: f32[2,32,1], index: 6, kind: input, shape index: {}]
  %s7 = inlined_call_operand.vmem [shape: f32[32,1], index: 7, kind: input, shape index: {}]
  %s8 = inlined_call_operand.<no memory space> [shape: f32[1,1], index: 8, kind: input, shape index: {}]
  %s9 = inlined_call_operand.vmem [shape: f32[1,128], index: 9, kind: output, shape index: {}]
  %s10 = sld [smem:[#allocation0]]
  $region46: #{cnn_forward.3} parent=0
    _
  %s12 = ssub.s32 1, %s10
  %s13 = scalar_select 0, %s12, %s10
  %v14 = vstv %s8
  %15 = vst [vmem:[#allocation2] sm:$0x1] %v14
  // Predicated region
  $region2: #{cnn_forward.3} parent=0 // pred_check
    _
  $region3: #{cnn_forward.3} parent=0 // pred_check_branch
    %17 = sbr.rel (0) target = $region5
  $region4: #{cnn_forward.3} parent=0 // pred_region
    _
  $region5: #{cnn_forward.3} parent=0 // pred_fallthru
    _
  // Predicated region
  $region6: #{cnn_forward.3} parent=0 // pred_check
    _
  $region7: #{cnn_forward.3} parent=0 // pred_check_branch
    %19 = sbr.rel (0) target = $region9
  $region8: #{cnn_forward.3} parent=0 // pred_region
    _
  $region9: #{cnn_forward.3} parent=0 // pred_fallthru
    _
  // Predicated region
  $region10: #{cnn_forward.3} parent=0 // pred_check
    _
  $region11: #{cnn_forward.3} parent=0 // pred_check_branch
    %21 = sbr.rel (0) target = $region13
  $region12: #{cnn_forward.3} parent=0 // pred_region
    _
  $region13: #{cnn_forward.3} parent=0 // pred_fallthru
    _
  // Predicated region
  $region14: #{cnn_forward.3} parent=0 // pred_check
    _
  $region15: #{cnn_forward.3} parent=0 // pred_check_branch
    %23 = sbr.rel (0) target = $region17
  $region16: #{cnn_forward.3} parent=0 // pred_region
    _
  $region17: #{cnn_forward.3} parent=0 // pred_fallthru
    _
  // Predicated region
  $region18: #{cnn_forward.3} parent=0 // pred_check
    _
  $region19: #{cnn_forward.3} parent=0 // pred_check_branch
    %25 = sbr.rel (0) target = $region21
  $region20: #{cnn_forward.3} parent=0 // pred_region
    _
  $region21: #{cnn_forward.3} parent=0 // pred_fallthru
    _
  // Predicated region
  $region22: #{cnn_forward.3} parent=0 // pred_check
    _
  $region23: #{cnn_forward.3} parent=0 // pred_check_branch
    %27 = sbr.rel (0) target = $region25
  $region24: #{cnn_forward.3} parent=0 // pred_region
    _
  $region25: #{cnn_forward.3} parent=0 // pred_fallthru
    _
  // Predicated region
  $region26: #{cnn_forward.3} parent=0 // pred_check
    _
  $region27: #{cnn_forward.3} parent=0 // pred_check_branch
    %29 = sbr.rel (0) target = $region29
  $region28: #{cnn_forward.3} parent=0 // pred_region
    _
  $region29: #{cnn_forward.3} parent=0 // pred_fallthru
    _
  // Predicated region
  $region30: #{cnn_forward.3} parent=0 // pred_check
    _
  $region31: #{cnn_forward.3} parent=0 // pred_check_branch
    %31 = sbr.rel (0) target = $region33
  $region32: #{cnn_forward.3} parent=0 // pred_region
    _
  $region33: #{cnn_forward.3} parent=0 // pred_fallthru
    _
  // Predicated region
  $region34: #{cnn_forward.3} parent=0 // pred_check
    _
  $region35: #{cnn_forward.3} parent=0 // pred_check_branch
    %33 = sbr.rel (0) target = $region37
  $region36: #{cnn_forward.3} parent=0 // pred_region
    _
  $region37: #{cnn_forward.3} parent=0 // pred_fallthru
    _
  %v35 = vld [vmem:[%s1] sm:$0xf]
  %v36 = vld [vmem:[%s1 + $0x4] sm:$0xf]
  %v37 = vld [vmem:[%s1 + $0x8] sm:$0xf]
  %v38 = vld [vmem:[%s1 + $0xc] sm:$0xf]
  %v39 = vld [vmem:[%s0] sm:$0xf]
  %v40 = vld [vmem:[%s2] sm:$0xff]
  %v41 = vld [vmem:[%s2 + $0x8] sm:$0xff]
  %v42 = vld [vmem:[%s2 + $0x10] sm:$0xff]
  %v43 = vld [vmem:[%s2 + $0x18] sm:$0xff]
  %45 = vset.pattern.permute.xlu0 0
  %46 = vperm.xlu0 %45, %v40
  %v47 = vpop.permute.xlu0 %46
  %50 = vset.pattern.permute.xlu0 0
  %51 = vperm.xlu0 %50, %v41
  %v52 = vpop.permute.xlu0 %51
  %55 = vset.pattern.permute.xlu0 0
  %56 = vperm.xlu0 %55, %v42
  %v57 = vpop.permute.xlu0 %56
  %60 = vset.pattern.permute.xlu0 0
  %61 = vperm.xlu0 %60, %v43
  %v62 = vpop.permute.xlu0 %61
  %v68 = vunpack.c.l.b16 %v35
  %v69 = vunpack.c.l.b16 %v36
  %v70 = vunpack.c.l.b16 %v37
  %v71 = vunpack.c.l.b16 %v38
  %v72 = vpack.c.b16 %v69, %v68
  %v73 = vpack.c.b16 %v71, %v70
  %vm74 = vcmask 56320
  %v76 = vsel %vm74, %v72, 0
  %v79 = vsel %vm74, %v73, 0
  %vm81 = vcmask 1042432
  %vm82 = vcmask 1043456
  %v83 = vsel %vm81, 4294967295, 65535
  %v84 = vsel %vm82, %v83, 0
  %v86 = vand.u32 %v39, %v84
  %88 = vmatprep.subr.bf16.mxu0 0
  %89 = vmatpush1.bf16.msra.mxu0 %v86
  %90 = vmatprep.subr.bf16.mxu0 0
  %91 = vmatpush1.bf16.msra.mxu0 0
  %92 = vmatprep.subr.bf16.mxu0 0
  %93 = vmatpush1.bf16.msra.mxu0 0
  %94 = vmatprep.subr.bf16.mxu0 0
  %95 = vmatpush1.bf16.msra.mxu0 0
  %96 = vmatprep.subr.bf16.mxu0 0
  %97 = vmatpush1.bf16.msra.mxu0 0
  %98 = vmatprep.subr.bf16.mxu0 0
  %99 = vmatpush1.bf16.msra.mxu0 0
  %100 = vmatprep.subr.bf16.mxu0 0
  %101 = vmatpush1.bf16.msra.mxu0 0
  %102 = vmatprep.subr.bf16.mxu0 0
  %103 = vmatpush1.bf16.msra.mxu0 0
  %104 = vmatprep.subr.bf16.mxu0 0
  %105 = vmatpush1.bf16.msra.mxu0 0
  %106 = vmatprep.subr.bf16.mxu0 0
  %107 = vmatpush1.bf16.msra.mxu0 0
  %108 = vmatprep.subr.bf16.mxu0 0
  %109 = vmatpush1.bf16.msra.mxu0 0
  %110 = vmatprep.subr.bf16.mxu0 0
  %111 = vmatpush1.bf16.msra.mxu0 0
  %112 = vmatprep.subr.bf16.mxu0 0
  %113 = vmatpush1.bf16.msra.mxu0 0
  %114 = vmatprep.subr.bf16.mxu0 0
  %115 = vmatpush1.bf16.msra.mxu0 0
  %116 = vmatprep.subr.bf16.mxu0 0
  %117 = vmatpush1.bf16.msra.mxu0 0
  %118 = vmatprep.subr.bf16.mxu0 0
  %119 = vmatpush1.bf16.msra.mxu0 0
  %120 = vmatprep.mubr.bf16.mxu0 0
  %121 = vmatmul.mubr.bf16.gmra.mrb[0].mxu0 %v76
  %v122 = vpop.f32.mrb[0].mxu0
  %v123 = vadd.f32 %v47, %v122
  %v124 = vpop.f32.mrb[0].mxu0
  %v125 = vpop.f32.mrb[0].mxu0
  %v126 = vadd.f32 %v52, %v125
  %v127 = vpop.f32.mrb[0].mxu0
  %128 = vmatprep.mubr.bf16.mxu0 0
  %129 = vmatmul.mubr.bf16.gmra.mrb[0].mxu0 %v79
  %v130 = vpop.f32.mrb[0].mxu0
  %v131 = vadd.f32 %v57, %v130
  %v132 = vpop.f32.mrb[0].mxu0
  %v133 = vpop.f32.mrb[0].mxu0
  %v134 = vadd.f32 %v62, %v133
  %v135 = vpop.f32.mrb[0].mxu0
  %136 = vdwg.mxu0
  %v137 = vld [vmem:[%s3] sm:$0xff]
  %v138 = vld [vmem:[%s3 + $0x8] sm:$0xff]
  %v139 = vld [vmem:[%s3 + $0x10] sm:$0xff]
  %v140 = vld [vmem:[%s3 + $0x18] sm:$0xff]
  %142 = vset.pattern.permute.xlu0 0
  %143 = vperm.xlu0 %142, %v137
  %v144 = vpop.permute.xlu0 %143
  %147 = vset.pattern.permute.xlu0 0
  %148 = vperm.xlu0 %147, %v138
  %v149 = vpop.permute.xlu0 %148
  %152 = vset.pattern.permute.xlu0 0
  %153 = vperm.xlu0 %152, %v139
  %v154 = vpop.permute.xlu0 %153
  %157 = vset.pattern.permute.xlu0 0
  %158 = vperm.xlu0 %157, %v140
  %v159 = vpop.permute.xlu0 %158
  %v161 = vmul.f32 %v123, %v144
  %v162 = vmul.f32 %v126, %v149
  %v163 = vmul.f32 %v131, %v154
  %v164 = vmul.f32 %v134, %v159
  %v165 = vld [vmem:[%s4] sm:$0xff]
  %v166 = vld [vmem:[%s4 + $0x8] sm:$0xff]
  %v167 = vld [vmem:[%s4 + $0x10] sm:$0xff]
  %v168 = vld [vmem:[%s4 + $0x18] sm:$0xff]
  %170 = vset.pattern.permute.xlu0 0
  %171 = vperm.xlu0 %170, %v165
  %v172 = vpop.permute.xlu0 %171
  %175 = vset.pattern.permute.xlu0 0
  %176 = vperm.xlu0 %175, %v166
  %v177 = vpop.permute.xlu0 %176
  %180 = vset.pattern.permute.xlu0 0
  %181 = vperm.xlu0 %180, %v167
  %v182 = vpop.permute.xlu0 %181
  %185 = vset.pattern.permute.xlu0 0
  %186 = vperm.xlu0 %185, %v168
  %v187 = vpop.permute.xlu0 %186
  %v189 = vadd.f32 %v161, %v172
  %v190 = vadd.f32 %v162, %v177
  %v191 = vadd.f32 %v163, %v182
  %v192 = vadd.f32 %v164, %v187
  %v193 = vld [vmem:[%s5] sm:$0xf]
  %v194 = vld [vmem:[%s5 + $0x4] sm:$0xf]
  %v195 = vld [vmem:[%s5 + $0x8] sm:$0xf]
  %v196 = vld [vmem:[%s5 + $0xc] sm:$0xf]
  %v197 = vpack.c.bf16 %v190, %v189
  %v198 = vpack.c.bf16 %v192, %v191
  %v199 = vld [vmem:[%s6] sm:$0xff]
  %v200 = vld [vmem:[%s6 + $0x8] sm:$0xff]
  %v201 = vld [vmem:[%s6 + $0x10] sm:$0xff]
  %v202 = vld [vmem:[%s6 + $0x18] sm:$0xff]
  %204 = vset.pattern.permute.xlu0 0
  %205 = vperm.xlu0 %204, %v199
  %v206 = vpop.permute.xlu0 %205
  %209 = vset.pattern.permute.xlu0 0
  %210 = vperm.xlu0 %209, %v200
  %v211 = vpop.permute.xlu0 %210
  %214 = vset.pattern.permute.xlu0 0
  %215 = vperm.xlu0 %214, %v201
  %v216 = vpop.permute.xlu0 %215
  %219 = vset.pattern.permute.xlu0 0
  %220 = vperm.xlu0 %219, %v202
  %v221 = vpop.permute.xlu0 %220
  %v227 = vunpack.c.l.b16 %v193
  %v228 = vunpack.c.l.b16 %v194
  %v229 = vunpack.c.l.b16 %v195
  %v230 = vunpack.c.l.b16 %v196
  %v231 = vpack.c.b16 %v228, %v227
  %v232 = vpack.c.b16 %v230, %v229
  %vm233 = vcmask 261120
  %v235 = vsel %vm233, %v231, 0
  %v238 = vsel %vm233, %v232, 0
  %240 = vmatprep.subr.bf16.mxu0 0
  %241 = vmatpush1.bf16.msra.mxu0 %v197
  %242 = vmatprep.subr.bf16.mxu0 0
  %243 = vmatpush1.bf16.msra.mxu0 %v198
  %244 = vmatprep.subr.bf16.mxu0 0
  %245 = vmatpush1.bf16.msra.mxu0 0
  %246 = vmatprep.subr.bf16.mxu0 0
  %247 = vmatpush1.bf16.msra.mxu0 0
  %248 = vmatprep.subr.bf16.mxu0 0
  %249 = vmatpush1.bf16.msra.mxu0 0
  %250 = vmatprep.subr.bf16.mxu0 0
  %251 = vmatpush1.bf16.msra.mxu0 0
  %252 = vmatprep.subr.bf16.mxu0 0
  %253 = vmatpush1.bf16.msra.mxu0 0
  %254 = vmatprep.subr.bf16.mxu0 0
  %255 = vmatpush1.bf16.msra.mxu0 0
  %256 = vmatprep.subr.bf16.mxu0 0
  %257 = vmatpush1.bf16.msra.mxu0 0
  %258 = vmatprep.subr.bf16.mxu0 0
  %259 = vmatpush1.bf16.msra.mxu0 0
  %260 = vmatprep.subr.bf16.mxu0 0
  %261 = vmatpush1.bf16.msra.mxu0 0
  %262 = vmatprep.subr.bf16.mxu0 0
  %263 = vmatpush1.bf16.msra.mxu0 0
  %264 = vmatprep.subr.bf16.mxu0 0
  %265 = vmatpush1.bf16.msra.mxu0 0
  %266 = vmatprep.subr.bf16.mxu0 0
  %267 = vmatpush1.bf16.msra.mxu0 0
  %268 = vmatprep.subr.bf16.mxu0 0
  %269 = vmatpush1.bf16.msra.mxu0 0
  %270 = vmatprep.subr.bf16.mxu0 0
  %271 = vmatpush1.bf16.msra.mxu0 0
  %272 = vmatprep.mubr.bf16.mxu0 0
  %273 = vmatmul.mubr.bf16.gmra.mrb[0].mxu0 %v235
  %v274 = vpop.f32.mrb[0].mxu0
  %v275 = vadd.f32 %v206, %v274
  %v276 = vpop.f32.mrb[0].mxu0
  %v277 = vpop.f32.mrb[0].mxu0
  %v278 = vadd.f32 %v211, %v277
  %v279 = vpop.f32.mrb[0].mxu0
  %280 = vmatprep.mubr.bf16.mxu0 0
  %281 = vmatmul.mubr.bf16.gmra.mrb[0].mxu0 %v238
  %v282 = vpop.f32.mrb[0].mxu0
  %v283 = vadd.f32 %v216, %v282
  %v284 = vpop.f32.mrb[0].mxu0
  %v285 = vpop.f32.mrb[0].mxu0
  %v286 = vadd.f32 %v221, %v285
  %v287 = vpop.f32.mrb[0].mxu0
  %288 = vdwg.mxu0
  %v289 = vmax.f32 %v275, 0.0
  %v290 = vmax.f32 %v278, 0.0
  %v291 = vmax.f32 %v283, 0.0
  %v292 = vmax.f32 %v286, 0.0
  %s293 = scalar_lea.vmem %s5, 16
  %v294 = vld [vmem:[%s293] sm:$0xf]
  %v295 = vld [vmem:[%s293 + $0x4] sm:$0xf]
  %v296 = vld [vmem:[%s293 + $0x8] sm:$0xf]
  %v297 = vld [vmem:[%s293 + $0xc] sm:$0xf]
  %v298 = vpack.c.bf16 %v290, %v289
  %v299 = vpack.c.bf16 %v292, %v291
  %s300 = scalar_lea.vmem %s6, 32
  %v301 = vld [vmem:[%s300] sm:$0xff]
  %v302 = vld [vmem:[%s300 + $0x8] sm:$0xff]
  %v303 = vld [vmem:[%s300 + $0x10] sm:$0xff]
  %v304 = vld [vmem:[%s300 + $0x18] sm:$0xff]
  %306 = vset.pattern.permute.xlu0 0
  %307 = vperm.xlu0 %306, %v301
  %v308 = vpop.permute.xlu0 %307
  %311 = vset.pattern.permute.xlu0 0
  %312 = vperm.xlu0 %311, %v302
  %v313 = vpop.permute.xlu0 %312
  %316 = vset.pattern.permute.xlu0 0
  %317 = vperm.xlu0 %316, %v303
  %v318 = vpop.permute.xlu0 %317
  %321 = vset.pattern.permute.xlu0 0
  %322 = vperm.xlu0 %321, %v304
  %v323 = vpop.permute.xlu0 %322
  %v329 = vunpack.c.l.b16 %v294
  %v330 = vunpack.c.l.b16 %v295
  %v331 = vunpack.c.l.b16 %v296
  %v332 = vunpack.c.l.b16 %v297
  %v333 = vpack.c.b16 %v330, %v329
  %v334 = vpack.c.b16 %v332, %v331
  %v336 = vsel %vm233, %v333, 0
  %v339 = vsel %vm233, %v334, 0
  %341 = vmatprep.subr.bf16.mxu0 0
  %342 = vmatpush1.bf16.msra.mxu0 %v298
  %343 = vmatprep.subr.bf16.mxu0 0
  %344 = vmatpush1.bf16.msra.mxu0 %v299
  %345 = vmatprep.subr.bf16.mxu0 0
  %346 = vmatpush1.bf16.msra.mxu0 0
  %347 = vmatprep.subr.bf16.mxu0 0
  %348 = vmatpush1.bf16.msra.mxu0 0
  %349 = vmatprep.subr.bf16.mxu0 0
  %350 = vmatpush1.bf16.msra.mxu0 0
  %351 = vmatprep.subr.bf16.mxu0 0
  %352 = vmatpush1.bf16.msra.mxu0 0
  %353 = vmatprep.subr.bf16.mxu0 0
  %354 = vmatpush1.bf16.msra.mxu0 0
  %355 = vmatprep.subr.bf16.mxu0 0
  %356 = vmatpush1.bf16.msra.mxu0 0
  %357 = vmatprep.subr.bf16.mxu0 0
  %358 = vmatpush1.bf16.msra.mxu0 0
  %359 = vmatprep.subr.bf16.mxu0 0
  %360 = vmatpush1.bf16.msra.mxu0 0
  %361 = vmatprep.subr.bf16.mxu0 0
  %362 = vmatpush1.bf16.msra.mxu0 0
  %363 = vmatprep.subr.bf16.mxu0 0
  %364 = vmatpush1.bf16.msra.mxu0 0
  %365 = vmatprep.subr.bf16.mxu0 0
  %366 = vmatpush1.bf16.msra.mxu0 0
  %367 = vmatprep.subr.bf16.mxu0 0
  %368 = vmatpush1.bf16.msra.mxu0 0
  %369 = vmatprep.subr.bf16.mxu0 0
  %370 = vmatpush1.bf16.msra.mxu0 0
  %371 = vmatprep.subr.bf16.mxu0 0
  %372 = vmatpush1.bf16.msra.mxu0 0
  %373 = vmatprep.mubr.bf16.mxu0 0
  %374 = vmatmul.mubr.bf16.gmra.mrb[0].mxu0 %v336
  %v375 = vpop.f32.mrb[0].mxu0
  %v376 = vadd.f32 %v308, %v375
  %v377 = vpop.f32.mrb[0].mxu0
  %v378 = vpop.f32.mrb[0].mxu0
  %v379 = vadd.f32 %v313, %v378
  %v380 = vpop.f32.mrb[0].mxu0
  %381 = vmatprep.mubr.bf16.mxu0 0
  %382 = vmatmul.mubr.bf16.gmra.mrb[0].mxu0 %v339
  %v383 = vpop.f32.mrb[0].mxu0
  %v384 = vadd.f32 %v318, %v383
  %v385 = vpop.f32.mrb[0].mxu0
  %v386 = vpop.f32.mrb[0].mxu0
  %v387 = vadd.f32 %v323, %v386
  %v388 = vpop.f32.mrb[0].mxu0
  %389 = vdwg.mxu0
  %v390 = vmax.f32 %v376, 0.0
  %v391 = vmax.f32 %v379, 0.0
  %v392 = vmax.f32 %v384, 0.0
  %v393 = vmax.f32 %v387, 0.0
  %v394 = vld [vmem:[%s7] sm:$0xff]
  %v395 = vld [vmem:[%s7 + $0x8] sm:$0xff]
  %v396 = vld [vmem:[%s7 + $0x10] sm:$0xff]
  %v397 = vld [vmem:[%s7 + $0x18] sm:$0xff]
  %399 = vset.pattern.permute.xlu0 0
  %400 = vperm.xlu0 %399, %v394
  %v401 = vpop.permute.xlu0 %400
  %404 = vset.pattern.permute.xlu0 0
  %405 = vperm.xlu0 %404, %v395
  %v406 = vpop.permute.xlu0 %405
  %409 = vset.pattern.permute.xlu0 0
  %410 = vperm.xlu0 %409, %v396
  %v411 = vpop.permute.xlu0 %410
  %414 = vset.pattern.permute.xlu0 0
  %415 = vperm.xlu0 %414, %v397
  %v416 = vpop.permute.xlu0 %415
  %v418 = vmul.f32 %v390, %v401
  %v419 = vmul.f32 %v391, %v406
  %v420 = vmul.f32 %v392, %v411
  %v421 = vmul.f32 %v393, %v416
  %v422 = vadd.f32 %v418, %v419
  %v423 = vadd.f32 %v422, %v420
  %v424 = vadd.f32 %v423, %v421
  %v425 = vrot.slane %v424, 4
  %v426 = vadd.f32 %v424, %v425
  %v427 = vrot.slane %v426, 2
  %v428 = vadd.f32 %v426, %v427
  %v429 = vrot.slane %v428, 1
  %v430 = vadd.f32 %v428, %v429
  %v431 = vld [vmem:[#allocation2] sm:$0x1]
  %433 = vset.pattern.permute.xlu0 0
  %434 = vperm.xlu0 %433, %v431
  %v435 = vpop.permute.xlu0 %434
  %v437 = vlaneseq
  %v438 = vshrl.u32 %v437, 7
  %v439 = vsub.s32 0, %v438
  %v440 = vrot.slane %v435, %v439
  %v441 = vadd.f32 %v430, %v440
  %442 = vst [vmem:[%s9] sm:$0x1] %v441
  // Predicated region
  $region38: #{cnn_forward.3} parent=0 // pred_check
    _
  $region39: #{cnn_forward.3} parent=0 // pred_check_branch
    %444 = sbr.rel (0) target = $region41
  $region40: #{cnn_forward.3} parent=0 // pred_region
    _
  $region41: #{cnn_forward.3} parent=0 // pred_fallthru
    _
  // Predicated region
  $region42: #{cnn_forward.3} parent=0 // pred_check
    _
  $region43: #{cnn_forward.3} parent=0 // pred_check_branch
    %446 = sbr.rel (0) target = $region45
  $region44: #{cnn_forward.3} parent=0 // pred_region
    _
  $region45: #{cnn_forward.3} parent=0 // pred_fallthru
    _

</llo_original>
